<compile_context>
chip_gen: v6e
topology: v6e:2x2x1
jax: 0.10.0
libtpu: 0.0.40
codegen_flags: <defaults>
</compile_context>

<pallas_src>
import functools

import numpy as np
import jax
import jax.numpy as jnp
from jax.experimental import pallas as pl
from jax.experimental.pallas import tpu as pltpu

BN_EPS = 1e-5

# The 8 masked (non-centre) taps, packed as rows of the (8, M) mask input.
_SHIFTS8 = ((-1, -1), (-1, 0), (-1, 1), (0, -1), (0, 1), (1, -1), (1, 0), (1, 1))
_SHIFT_ROW = {s: r for r, s in enumerate(_SHIFTS8)}
# Distinct phase-coordinate shifts needed by the 3x3 stride-2 conv.
_S2_SHIFTS = ((0, 0), (0, -1), (-1, 0), (-1, -1))
# stride-2 kernel tap index -> (input parity, shift in phase coordinates)
_TAP2 = {0: (1, -1), 1: (0, 0), 2: (1, 0)}


# ---------------------------------------------------------------------------
# Fused Tree kernel (single pallas_call, one image per grid step)
# ---------------------------------------------------------------------------
def _tree_fused_kernel(ph_ref, msk_ref, w_ref, o_ref, *, cin, cout, ho, wo):
    """Whole Tree forward for one image.

    Activation layout: (C, M) with channels on sublanes and M = Ho*Wo output
    positions on lanes.  Every 3x3 conv is ONE (Cout, K) @ (K, M) matmul on a
    K-stacked im2col patch built from pltpu.roll-shifted, boundary-masked
    views of the resident activation.
    """
    f32 = jnp.float32
    m = ho * wo
    relu = lambda v: jnp.maximum(v, f32(0))

    ph = ph_ref[0]            # (4*cin, m)  packed even/odd phases of the input
    masks = msk_ref[...]      # (8, m)      0/1 boundary-validity masks
    wsl = w_ref[...]          # (cout, Ktot) packed, BN-folded weights + biases

    def shifted(a, dy, dx):
        """a[:, p] -> a[:, p + dy*wo + dx], zeroed where the tap leaves the
        image (wrap-around lanes are always masked)."""
        s = dy * wo + dx
        if s:
            a = pltpu.roll(a, (-s) % m, axis=1)
        if (dy, dx) != (0, 0):
            r = _SHIFT_ROW[(dy, dx)]
            a = a * masks[r:r + 1, :]
        return a

    # Static column offsets inside the packed weight slab.
    k_s2, k_s1, k_pr, k_rt = 16 * cin, 9 * cout, cin, 2 * cout + cin
    o_w1a = 0
    o_w1b = o_w1a + k_s2
    o_w2a = o_w1b + k_s1
    o_w2b = o_w2a + k_s1
    o_wpr = o_w2b + k_s1
    o_wrt = o_wpr + k_pr
    o_bias = o_wrt + k_rt
    bias = lambda i: wsl[:, o_bias + i:o_bias + i + 1]          # (cout, 1)

    # -- downsample: MaxPool2d(2,2) == elementwise max of the 4 phases --------
    p00 = ph[0 * cin:1 * cin]
    p01 = ph[1 * cin:2 * cin]
    p10 = ph[2 * cin:3 * cin]
    p11 = ph[3 * cin:4 * cin]
    bottom = jnp.maximum(jnp.maximum(p00, p01), jnp.maximum(p10, p11))

    # -- project: 1x1 conv + BN (scale folded into the weight) ----------------
    residual = (jnp.dot(wsl[:, o_wpr:o_wpr + k_pr], bottom,
                        preferred_element_type=f32) + bias(4))

    # -- 3x3 stride-2 conv: 4 whole-block phase shifts, ONE matmul (K=16*cin) --
    p2 = jnp.concatenate([shifted(ph, dy, dx) for dy, dx in _S2_SHIFTS], axis=0)
    t1 = relu(jnp.dot(wsl[:, o_w1a:o_w1a + k_s2], p2,
                      preferred_element_type=f32) + bias(0))

    # -- 3x3 stride-1 conv: 9 shifted views K-stacked, ONE matmul (K=9*cout) ---
    def conv3x3_s1(x, off):
        p = jnp.concatenate([shifted(x, dy, dx)
                             for dy in (-1, 0, 1) for dx in (-1, 0, 1)], axis=0)
        return jnp.dot(wsl[:, off:off + k_s1], p, preferred_element_type=f32)

    # tree1 = BasicBlock(cin -> cout, stride 2), residual = project(bottom)
    x1 = relu(conv3x3_s1(t1, o_w1b) + bias(1) + residual)
    # tree2 = BasicBlock(cout -> cout, stride 1), residual = x1
    t2 = relu(conv3x3_s1(x1, o_w2a) + bias(2))
    x2 = relu(conv3x3_s1(t2, o_w2b) + bias(3) + x1)

    # root: ReLU(BN(Conv1x1(cat[x2, x1, bottom]))) as ONE matmul (K=2*cout+cin)
    cat = jnp.concatenate([x2, x1, bottom], axis=0)
    out = jnp.dot(wsl[:, o_wrt:o_wrt + k_rt], cat,
                  preferred_element_type=f32) + bias(5)
    o_ref[0] = relu(out).astype(o_ref.dtype)


# ---------------------------------------------------------------------------
# Wrapper glue: BN folding, weight/phase packing, pallas_call plumbing
# ---------------------------------------------------------------------------
def _fold_conv_bn(w_oihw, bn):
    s = bn['gamma'] / jnp.sqrt(bn['var'] + BN_EPS)
    b = bn['beta'] - bn['mean'] * s
    return w_oihw * s[:, None, None, None], b.reshape(-1, 1)


def _s1_weight(w):
    """(co, ci, 3, 3) -> (co, 9*ci), tap-major, matching the kernel's
    (dy, dx) patch-stacking order."""
    co, ci = w.shape[0], w.shape[1]
    return jnp.transpose(w, (0, 2, 3, 1)).reshape(co, 9 * ci)


def _s2_weight(w):
    """(co, ci, 3, 3) -> (co, 16*ci): column block (shift_idx, phase_idx, ci)
    matching the kernel's 4-shift stacked packed-phase patch."""
    co, ci = w.shape[0], w.shape[1]
    out = jnp.zeros((co, 4 * 4 * ci), w.dtype)
    for ky in range(3):
        py, dy = _TAP2[ky]
        for kx in range(3):
            px, dx = _TAP2[kx]
            si = _S2_SHIFTS.index((dy, dx))
            col = (si * 4 + (2 * py + px)) * ci
            out = out.at[:, col:col + ci].set(w[:, :, ky, kx])
    return out


def _boundary_masks(ho, wo):
    """(8, ho*wo) f32 0/1 masks, one row per non-centre tap shift."""
    ii, jj = np.meshgrid(np.arange(ho), np.arange(wo), indexing='ij')
    ii, jj = ii.reshape(-1), jj.reshape(-1)
    rows = [((ii + dy >= 0) & (ii + dy < ho) & (jj + dx >= 0) & (jj + dx < wo))
            for dy, dx in _SHIFTS8]
    return jnp.asarray(np.stack(rows).astype(np.float32))


def tree_forward_pallas(x_nchw, params):
    n, cin, h, w = x_nchw.shape
    # TODO(synk): PyTorch MaxPool2d(2,2) silently truncates odd H/W; we assert.
    assert h % 2 == 0 and w % 2 == 0, "MaxPool2d(2,2) path assumes even H, W"
    ho, wo = h // 2, w // 2
    m = ho * wo
    cout = params['project']['conv'].shape[0]

    # Pack the four even/odd phases into ONE (n, 4*cin, m) array in a single
    # XLA transpose.  Rows: (2*py + px)*cin + c ; lanes: i*wo + j.
    x = x_nchw.astype(jnp.float32)
    ph = x.reshape(n, cin, ho, 2, wo, 2)
    ph = jnp.transpose(ph, (0, 3, 5, 1, 2, 4)).reshape(n, 4 * cin, m)

    # Fold BN into the convs and pack every weight + bias into one slab.
    w1a, b1a = _fold_conv_bn(params['tree1']['conv1'], params['tree1']['bn1'])
    w1b, b1b = _fold_conv_bn(params['tree1']['conv2'], params['tree1']['bn2'])
    w2a, b2a = _fold_conv_bn(params['tree2']['conv1'], params['tree2']['bn1'])
    w2b, b2b = _fold_conv_bn(params['tree2']['conv2'], params['tree2']['bn2'])
    wpr, bpr = _fold_conv_bn(params['project']['conv'], params['project']['bn'])
    wrt, brt = _fold_conv_bn(params['root']['conv'], params['root']['bn'])
    wslab = jnp.concatenate(
        [_s2_weight(w1a), _s1_weight(w1b), _s1_weight(w2a), _s1_weight(w2b),
         wpr[:, :, 0, 0], wrt[:, :, 0, 0],
         jnp.concatenate([b1a, b1b, b2a, b2b, bpr, brt], axis=1)],
        axis=1).astype(jnp.float32)
    ktot = wslab.shape[1]

    masks = _boundary_masks(ho, wo)

    kern = functools.partial(_tree_fused_kernel, cin=cin, cout=cout, ho=ho, wo=wo)
    out = pl.pallas_call(
        kern,
        grid=(n,),
        in_specs=[pl.BlockSpec((1, 4 * cin, m), lambda b: (b, 0, 0)),
                  pl.BlockSpec((8, m), lambda b: (0, 0)),        # loaded once
                  pl.BlockSpec((cout, ktot), lambda b: (0, 0))],  # loaded once
        out_specs=pl.BlockSpec((1, cout, m), lambda b: (b, 0, 0)),
        out_shape=jax.ShapeDtypeStruct((n, cout, m), jnp.float32),
        compiler_params=pltpu.CompilerParams(
            dimension_semantics=("parallel",)),   # batch shards across TCs
    )(ph, masks, wslab)

    return out.reshape(n, cout, ho, wo)           # free reshape, already NCHW


# ---------------------------------------------------------------------------
# Deterministic parameter init (synthetic weights, no checkpoint)
# ---------------------------------------------------------------------------
def init_params(key, cin=4, cout=8):
    keys = iter(jax.random.split(key, 16))

    def conv_w(k, co, ci, ks):
        std = (2.0 / (ci * ks * ks)) ** 0.5
        return std * jax.random.normal(k, (co, ci, ks, ks), jnp.float32)

    def bn_p(k, c):
        k1, k2, k3, k4 = jax.random.split(k, 4)
        return dict(gamma=jax.random.uniform(k1, (c,), minval=0.8, maxval=1.2),
                    beta=0.1 * jax.random.normal(k2, (c,)),
                    mean=0.1 * jax.random.normal(k3, (c,)),
                    var=jax.random.uniform(k4, (c,), minval=0.5, maxval=1.5))

    root_dim = 2 * cout + cin                       # root_dim=0, level_root=True
    return dict(
        tree1=dict(conv1=conv_w(next(keys), cout, cin, 3), bn1=bn_p(next(keys), cout),
                   conv2=conv_w(next(keys), cout, cout, 3), bn2=bn_p(next(keys), cout)),
        tree2=dict(conv1=conv_w(next(keys), cout, cout, 3), bn1=bn_p(next(keys), cout),
                   conv2=conv_w(next(keys), cout, cout, 3), bn2=bn_p(next(keys), cout)),
        root=dict(conv=conv_w(next(keys), cout, root_dim, 1), bn=bn_p(next(keys), cout)),
        project=dict(conv=conv_w(next(keys), cout, cin, 1), bn=bn_p(next(keys), cout)),
    )


# ---------------------------------------------------------------------------
# Pure-JAX (NCHW) reference mirroring the PyTorch module, for verification
# ---------------------------------------------------------------------------
def conv_ref(x, w, stride=1, padding=0, dilation=1):
    return jax.lax.conv_general_dilated(
        x, w, (stride, stride), [(padding, padding)] * 2,
        rhs_dilation=(dilation, dilation),
        dimension_numbers=('NCHW', 'OIHW', 'NCHW'))


def bn_ref(x, p):
    s = p['gamma'] / jnp.sqrt(p['var'] + BN_EPS)
    b = p['beta'] - p['mean'] * s
    return x * s[None, :, None, None] + b[None, :, None, None]


def basic_block_ref(x, p, residual, stride=1, dilation=1):
    out = jax.nn.relu(bn_ref(conv_ref(x, p['conv1'], stride, dilation, dilation), p['bn1']))
    out = bn_ref(conv_ref(out, p['conv2'], 1, dilation, dilation), p['bn2'])
    return jax.nn.relu(out + residual)


def tree_ref(x, params):
    bottom = jax.lax.reduce_window(x, -jnp.inf, jax.lax.max,
                                   (1, 1, 2, 2), (1, 1, 2, 2), 'VALID')
    residual = bn_ref(conv_ref(bottom, params['project']['conv']), params['project']['bn'])
    children = [bottom]
    x1 = basic_block_ref(x, params['tree1'], residual, stride=2)
    x2 = basic_block_ref(x1, params['tree2'], x1, stride=1)
    cat = jnp.concatenate([x2, x1] + children, axis=1)
    return jax.nn.relu(bn_ref(conv_ref(cat, params['root']['conv']), params['root']['bn']))


if __name__ == "__main__":
    key = jax.random.PRNGKey(0)
    kx, kp = jax.random.split(key)
    # 32x32 input -> per-image lane width ho*wo = 256 (128-aligned, unmasked stores).
    N, Cin, H, W = 2, 4, 32, 32
    Cout = 8

    x = jax.random.normal(kx, (N, Cin, H, W), jnp.float32)
    params = init_params(kp, Cin, Cout)

    out = jax.block_until_ready(jax.jit(tree_forward_pallas)(x, params))
    ref = jax.block_until_ready(tree_ref(x, params))

    assert out.shape == (N, Cout, H // 2, W // 2)
    np.testing.assert_allclose(np.asarray(out), np.asarray(ref), rtol=5e-2, atol=5e-2)
    print("KERNEL_OK")
</pallas_src>

<mosaic_0001>
module attributes {stable_mosaic.version = 11 : i64} {
  func.func @_tree_fused_kernel(%arg0: i32, %arg1: memref<1x16x256xf32, #tpu.memory_space<vmem>>, %arg2: memref<8x256xf32, #tpu.memory_space<vmem>>, %arg3: memref<8x310xf32, #tpu.memory_space<vmem>>, %arg4: memref<1x8x256xf32, #tpu.memory_space<vmem>>) attributes {dimension_semantics = [#tpu.dimension_semantics<parallel>], iteration_bounds = array<i64: 2>, scalar_prefetch = 0 : i64, scratch_operands = 0 : i64, tpu.core_type = #tpu.core_type<tc>, window_params = [{transform_indices = @transform_0, window_bounds = array<i64: 1, 16, 256>}, {pipeline_mode = #tpu.pipeline_mode<synchronous>, transform_indices = @transform_1, window_bounds = array<i64: 8, 256>}, {pipeline_mode = #tpu.pipeline_mode<synchronous>, transform_indices = @transform_2, window_bounds = array<i64: 8, 310>}, {transform_indices = @transform_3, window_bounds = array<i64: 1, 8, 256>}]} {
    %c0 = arith.constant 0 : index
    %c0_0 = arith.constant 0 : index
    %c0_1 = arith.constant 0 : index
    %0 = vector.load %arg1[%c0, %c0_0, %c0_1] : memref<1x16x256xf32, #tpu.memory_space<vmem>>, vector<1x16x256xf32>
    %1 = vector.shape_cast %0 : vector<1x16x256xf32> to vector<16x256xf32>
    %c0_2 = arith.constant 0 : index
    %c0_3 = arith.constant 0 : index
    %2 = vector.load %arg2[%c0_2, %c0_3] : memref<8x256xf32, #tpu.memory_space<vmem>>, vector<8x256xf32>
    %c0_4 = arith.constant 0 : index
    %c0_5 = arith.constant 0 : index
    %3 = vector.load %arg3[%c0_4, %c0_5] : memref<8x310xf32, #tpu.memory_space<vmem>>, vector<8x310xf32>
    %4 = vector.extract_strided_slice %1 {offsets = [0, 0], sizes = [4, 256], strides = [1, 1]} : vector<16x256xf32> to vector<4x256xf32>
    %5 = vector.extract_strided_slice %1 {offsets = [4, 0], sizes = [4, 256], strides = [1, 1]} : vector<16x256xf32> to vector<4x256xf32>
    %6 = vector.extract_strided_slice %1 {offsets = [8, 0], sizes = [4, 256], strides = [1, 1]} : vector<16x256xf32> to vector<4x256xf32>
    %7 = vector.extract_strided_slice %1 {offsets = [12, 0], sizes = [4, 256], strides = [1, 1]} : vector<16x256xf32> to vector<4x256xf32>
    %8 = arith.maximumf %4, %5 : vector<4x256xf32>
    %9 = arith.maximumf %6, %7 : vector<4x256xf32>
    %10 = arith.maximumf %8, %9 : vector<4x256xf32>
    %11 = vector.extract_strided_slice %3 {offsets = [0, 280], sizes = [8, 4], strides = [1, 1]} : vector<8x310xf32> to vector<8x4xf32>
    %cst = arith.constant dense<0.000000e+00> : vector<8x256xf32>
    %12 = tpu.matmul %11, %10, %cst {dimension_numbers = #tpu.dot_dimension_numbers<[1], [0], [0], [1], [0, 0, 1, 1], [], []>} : vector<8x4xf32>, vector<4x256xf32>, vector<8x256xf32> -> vector<8x256xf32>
    %13 = vector.extract_strided_slice %3 {offsets = [0, 308], sizes = [8, 1], strides = [1, 1]} : vector<8x310xf32> to vector<8x1xf32>
    %14 = vector.broadcast %13 : vector<8x1xf32> to vector<8x256xf32>
    %15 = arith.addf %12, %14 : vector<8x256xf32>
    %c1_i32 = arith.constant 1 : i32
    %16 = tpu.dynamic_rotate %1 by %c1_i32 dim 1 : vector<16x256xf32>, i32 -> vector<16x256xf32>
    %17 = vector.extract_strided_slice %2 {offsets = [3, 0], sizes = [1, 256], strides = [1, 1]} : vector<8x256xf32> to vector<1x256xf32>
    %18 = vector.broadcast %17 : vector<1x256xf32> to vector<16x256xf32>
    %19 = arith.mulf %16, %18 : vector<16x256xf32>
    %c16_i32 = arith.constant 16 : i32
    %20 = tpu.dynamic_rotate %1 by %c16_i32 dim 1 : vector<16x256xf32>, i32 -> vector<16x256xf32>
    %21 = vector.extract_strided_slice %2 {offsets = [1, 0], sizes = [1, 256], strides = [1, 1]} : vector<8x256xf32> to vector<1x256xf32>
    %22 = vector.broadcast %21 : vector<1x256xf32> to vector<16x256xf32>
    %23 = arith.mulf %20, %22 : vector<16x256xf32>
    %c17_i32 = arith.constant 17 : i32
    %24 = tpu.dynamic_rotate %1 by %c17_i32 dim 1 : vector<16x256xf32>, i32 -> vector<16x256xf32>
    %25 = vector.extract_strided_slice %2 {offsets = [0, 0], sizes = [1, 256], strides = [1, 1]} : vector<8x256xf32> to vector<1x256xf32>
    %26 = vector.broadcast %25 : vector<1x256xf32> to vector<16x256xf32>
    %27 = arith.mulf %24, %26 : vector<16x256xf32>
    %28 = tpu.concatenate %1, %19, %23, %27 in 0 : vector<16x256xf32>, vector<16x256xf32>, vector<16x256xf32>, vector<16x256xf32> -> vector<64x256xf32>
    %29 = vector.extract_strided_slice %3 {offsets = [0, 0], sizes = [8, 64], strides = [1, 1]} : vector<8x310xf32> to vector<8x64xf32>
    %cst_6 = arith.constant dense<0.000000e+00> : vector<8x256xf32>
    %30 = tpu.matmul %29, %28, %cst_6 {dimension_numbers = #tpu.dot_dimension_numbers<[1], [0], [0], [1], [0, 0, 1, 1], [], []>} : vector<8x64xf32>, vector<64x256xf32>, vector<8x256xf32> -> vector<8x256xf32>
    %31 = vector.extract_strided_slice %3 {offsets = [0, 304], sizes = [8, 1], strides = [1, 1]} : vector<8x310xf32> to vector<8x1xf32>
    %32 = vector.broadcast %31 : vector<8x1xf32> to vector<8x256xf32>
    %33 = arith.addf %30, %32 : vector<8x256xf32>
    %cst_7 = arith.constant 0.000000e+00 : f32
    %34 = vector.broadcast %cst_7 : f32 to vector<8x256xf32>
    %35 = arith.maximumf %33, %34 : vector<8x256xf32>
    %c17_i32_8 = arith.constant 17 : i32
    %36 = tpu.dynamic_rotate %35 by %c17_i32_8 dim 1 : vector<8x256xf32>, i32 -> vector<8x256xf32>
    %37 = vector.extract_strided_slice %2 {offsets = [0, 0], sizes = [1, 256], strides = [1, 1]} : vector<8x256xf32> to vector<1x256xf32>
    %38 = vector.broadcast %37 : vector<1x256xf32> to vector<8x256xf32>
    %39 = arith.mulf %36, %38 : vector<8x256xf32>
    %c16_i32_9 = arith.constant 16 : i32
    %40 = tpu.dynamic_rotate %35 by %c16_i32_9 dim 1 : vector<8x256xf32>, i32 -> vector<8x256xf32>
    %41 = vector.extract_strided_slice %2 {offsets = [1, 0], sizes = [1, 256], strides = [1, 1]} : vector<8x256xf32> to vector<1x256xf32>
    %42 = vector.broadcast %41 : vector<1x256xf32> to vector<8x256xf32>
    %43 = arith.mulf %40, %42 : vector<8x256xf32>
    %c15_i32 = arith.constant 15 : i32
    %44 = tpu.dynamic_rotate %35 by %c15_i32 dim 1 : vector<8x256xf32>, i32 -> vector<8x256xf32>
    %45 = vector.extract_strided_slice %2 {offsets = [2, 0], sizes = [1, 256], strides = [1, 1]} : vector<8x256xf32> to vector<1x256xf32>
    %46 = vector.broadcast %45 : vector<1x256xf32> to vector<8x256xf32>
    %47 = arith.mulf %44, %46 : vector<8x256xf32>
    %c1_i32_10 = arith.constant 1 : i32
    %48 = tpu.dynamic_rotate %35 by %c1_i32_10 dim 1 : vector<8x256xf32>, i32 -> vector<8x256xf32>
    %49 = vector.extract_strided_slice %2 {offsets = [3, 0], sizes = [1, 256], strides = [1, 1]} : vector<8x256xf32> to vector<1x256xf32>
    %50 = vector.broadcast %49 : vector<1x256xf32> to vector<8x256xf32>
    %51 = arith.mulf %48, %50 : vector<8x256xf32>
    %c255_i32 = arith.constant 255 : i32
    %52 = tpu.dynamic_rotate %35 by %c255_i32 dim 1 : vector<8x256xf32>, i32 -> vector<8x256xf32>
    %53 = vector.extract_strided_slice %2 {offsets = [4, 0], sizes = [1, 256], strides = [1, 1]} : vector<8x256xf32> to vector<1x256xf32>
    %54 = vector.broadcast %53 : vector<1x256xf32> to vector<8x256xf32>
    %55 = arith.mulf %52, %54 : vector<8x256xf32>
    %c241_i32 = arith.constant 241 : i32
    %56 = tpu.dynamic_rotate %35 by %c241_i32 dim 1 : vector<8x256xf32>, i32 -> vector<8x256xf32>
    %57 = vector.extract_strided_slice %2 {offsets = [5, 0], sizes = [1, 256], strides = [1, 1]} : vector<8x256xf32> to vector<1x256xf32>
    %58 = vector.broadcast %57 : vector<1x256xf32> to vector<8x256xf32>
    %59 = arith.mulf %56, %58 : vector<8x256xf32>
    %c240_i32 = arith.constant 240 : i32
    %60 = tpu.dynamic_rotate %35 by %c240_i32 dim 1 : vector<8x256xf32>, i32 -> vector<8x256xf32>
    %61 = vector.extract_strided_slice %2 {offsets = [6, 0], sizes = [1, 256], strides = [1, 1]} : vector<8x256xf32> to vector<1x256xf32>
    %62 = vector.broadcast %61 : vector<1x256xf32> to vector<8x256xf32>
    %63 = arith.mulf %60, %62 : vector<8x256xf32>
    %c239_i32 = arith.constant 239 : i32
    %64 = tpu.dynamic_rotate %35 by %c239_i32 dim 1 : vector<8x256xf32>, i32 -> vector<8x256xf32>
    %65 = vector.extract_strided_slice %2 {offsets = [7, 0], sizes = [1, 256], strides = [1, 1]} : vector<8x256xf32> to vector<1x256xf32>
    %66 = vector.broadcast %65 : vector<1x256xf32> to vector<8x256xf32>
    %67 = arith.mulf %64, %66 : vector<8x256xf32>
    %68 = tpu.concatenate %39, %43, %47, %51, %35, %55, %59, %63, %67 in 0 : vector<8x256xf32>, vector<8x256xf32>, vector<8x256xf32>, vector<8x256xf32>, vector<8x256xf32>, vector<8x256xf32>, vector<8x256xf32>, vector<8x256xf32>, vector<8x256xf32> -> vector<72x256xf32>
    %69 = vector.extract_strided_slice %3 {offsets = [0, 64], sizes = [8, 72], strides = [1, 1]} : vector<8x310xf32> to vector<8x72xf32>
    %cst_11 = arith.constant dense<0.000000e+00> : vector<8x256xf32>
    %70 = tpu.matmul %69, %68, %cst_11 {dimension_numbers = #tpu.dot_dimension_numbers<[1], [0], [0], [1], [0, 0, 1, 1], [], []>} : vector<8x72xf32>, vector<72x256xf32>, vector<8x256xf32> -> vector<8x256xf32>
    %71 = vector.extract_strided_slice %3 {offsets = [0, 305], sizes = [8, 1], strides = [1, 1]} : vector<8x310xf32> to vector<8x1xf32>
    %72 = vector.broadcast %71 : vector<8x1xf32> to vector<8x256xf32>
    %73 = arith.addf %70, %72 : vector<8x256xf32>
    %74 = arith.addf %73, %15 : vector<8x256xf32>
    %cst_12 = arith.constant 0.000000e+00 : f32
    %75 = vector.broadcast %cst_12 : f32 to vector<8x256xf32>
    %76 = arith.maximumf %74, %75 : vector<8x256xf32>
    %c17_i32_13 = arith.constant 17 : i32
    %77 = tpu.dynamic_rotate %76 by %c17_i32_13 dim 1 : vector<8x256xf32>, i32 -> vector<8x256xf32>
    %78 = vector.extract_strided_slice %2 {offsets = [0, 0], sizes = [1, 256], strides = [1, 1]} : vector<8x256xf32> to vector<1x256xf32>
    %79 = vector.broadcast %78 : vector<1x256xf32> to vector<8x256xf32>
    %80 = arith.mulf %77, %79 : vector<8x256xf32>
    %c16_i32_14 = arith.constant 16 : i32
    %81 = tpu.dynamic_rotate %76 by %c16_i32_14 dim 1 : vector<8x256xf32>, i32 -> vector<8x256xf32>
    %82 = vector.extract_strided_slice %2 {offsets = [1, 0], sizes = [1, 256], strides = [1, 1]} : vector<8x256xf32> to vector<1x256xf32>
    %83 = vector.broadcast %82 : vector<1x256xf32> to vector<8x256xf32>
    %84 = arith.mulf %81, %83 : vector<8x256xf32>
    %c15_i32_15 = arith.constant 15 : i32
    %85 = tpu.dynamic_rotate %76 by %c15_i32_15 dim 1 : vector<8x256xf32>, i32 -> vector<8x256xf32>
    %86 = vector.extract_strided_slice %2 {offsets = [2, 0], sizes = [1, 256], strides = [1, 1]} : vector<8x256xf32> to vector<1x256xf32>
    %87 = vector.broadcast %86 : vector<1x256xf32> to vector<8x256xf32>
    %88 = arith.mulf %85, %87 : vector<8x256xf32>
    %c1_i32_16 = arith.constant 1 : i32
    %89 = tpu.dynamic_rotate %76 by %c1_i32_16 dim 1 : vector<8x256xf32>, i32 -> vector<8x256xf32>
    %90 = vector.extract_strided_slice %2 {offsets = [3, 0], sizes = [1, 256], strides = [1, 1]} : vector<8x256xf32> to vector<1x256xf32>
    %91 = vector.broadcast %90 : vector<1x256xf32> to vector<8x256xf32>
    %92 = arith.mulf %89, %91 : vector<8x256xf32>
    %c255_i32_17 = arith.constant 255 : i32
    %93 = tpu.dynamic_rotate %76 by %c255_i32_17 dim 1 : vector<8x256xf32>, i32 -> vector<8x256xf32>
    %94 = vector.extract_strided_slice %2 {offsets = [4, 0], sizes = [1, 256], strides = [1, 1]} : vector<8x256xf32> to vector<1x256xf32>
    %95 = vector.broadcast %94 : vector<1x256xf32> to vector<8x256xf32>
    %96 = arith.mulf %93, %95 : vector<8x256xf32>
    %c241_i32_18 = arith.constant 241 : i32
    %97 = tpu.dynamic_rotate %76 by %c241_i32_18 dim 1 : vector<8x256xf32>, i32 -> vector<8x256xf32>
    %98 = vector.extract_strided_slice %2 {offsets = [5, 0], sizes = [1, 256], strides = [1, 1]} : vector<8x256xf32> to vector<1x256xf32>
    %99 = vector.broadcast %98 : vector<1x256xf32> to vector<8x256xf32>
    %100 = arith.mulf %97, %99 : vector<8x256xf32>
    %c240_i32_19 = arith.constant 240 : i32
    %101 = tpu.dynamic_rotate %76 by %c240_i32_19 dim 1 : vector<8x256xf32>, i32 -> vector<8x256xf32>
    %102 = vector.extract_strided_slice %2 {offsets = [6, 0], sizes = [1, 256], strides = [1, 1]} : vector<8x256xf32> to vector<1x256xf32>
    %103 = vector.broadcast %102 : vector<1x256xf32> to vector<8x256xf32>
    %104 = arith.mulf %101, %103 : vector<8x256xf32>
    %c239_i32_20 = arith.constant 239 : i32
    %105 = tpu.dynamic_rotate %76 by %c239_i32_20 dim 1 : vector<8x256xf32>, i32 -> vector<8x256xf32>
    %106 = vector.extract_strided_slice %2 {offsets = [7, 0], sizes = [1, 256], strides = [1, 1]} : vector<8x256xf32> to vector<1x256xf32>
    %107 = vector.broadcast %106 : vector<1x256xf32> to vector<8x256xf32>
    %108 = arith.mulf %105, %107 : vector<8x256xf32>
    %109 = tpu.concatenate %80, %84, %88, %92, %76, %96, %100, %104, %108 in 0 : vector<8x256xf32>, vector<8x256xf32>, vector<8x256xf32>, vector<8x256xf32>, vector<8x256xf32>, vector<8x256xf32>, vector<8x256xf32>, vector<8x256xf32>, vector<8x256xf32> -> vector<72x256xf32>
    %110 = vector.extract_strided_slice %3 {offsets = [0, 136], sizes = [8, 72], strides = [1, 1]} : vector<8x310xf32> to vector<8x72xf32>
    %cst_21 = arith.constant dense<0.000000e+00> : vector<8x256xf32>
    %111 = tpu.matmul %110, %109, %cst_21 {dimension_numbers = #tpu.dot_dimension_numbers<[1], [0], [0], [1], [0, 0, 1, 1], [], []>} : vector<8x72xf32>, vector<72x256xf32>, vector<8x256xf32> -> vector<8x256xf32>
    %112 = vector.extract_strided_slice %3 {offsets = [0, 306], sizes = [8, 1], strides = [1, 1]} : vector<8x310xf32> to vector<8x1xf32>
    %113 = vector.broadcast %112 : vector<8x1xf32> to vector<8x256xf32>
    %114 = arith.addf %111, %113 : vector<8x256xf32>
    %cst_22 = arith.constant 0.000000e+00 : f32
    %115 = vector.broadcast %cst_22 : f32 to vector<8x256xf32>
    %116 = arith.maximumf %114, %115 : vector<8x256xf32>
    %c17_i32_23 = arith.constant 17 : i32
    %117 = tpu.dynamic_rotate %116 by %c17_i32_23 dim 1 : vector<8x256xf32>, i32 -> vector<8x256xf32>
    %118 = vector.extract_strided_slice %2 {offsets = [0, 0], sizes = [1, 256], strides = [1, 1]} : vector<8x256xf32> to vector<1x256xf32>
    %119 = vector.broadcast %118 : vector<1x256xf32> to vector<8x256xf32>
    %120 = arith.mulf %117, %119 : vector<8x256xf32>
    %c16_i32_24 = arith.constant 16 : i32
    %121 = tpu.dynamic_rotate %116 by %c16_i32_24 dim 1 : vector<8x256xf32>, i32 -> vector<8x256xf32>
    %122 = vector.extract_strided_slice %2 {offsets = [1, 0], sizes = [1, 256], strides = [1, 1]} : vector<8x256xf32> to vector<1x256xf32>
    %123 = vector.broadcast %122 : vector<1x256xf32> to vector<8x256xf32>
    %124 = arith.mulf %121, %123 : vector<8x256xf32>
    %c15_i32_25 = arith.constant 15 : i32
    %125 = tpu.dynamic_rotate %116 by %c15_i32_25 dim 1 : vector<8x256xf32>, i32 -> vector<8x256xf32>
    %126 = vector.extract_strided_slice %2 {offsets = [2, 0], sizes = [1, 256], strides = [1, 1]} : vector<8x256xf32> to vector<1x256xf32>
    %127 = vector.broadcast %126 : vector<1x256xf32> to vector<8x256xf32>
    %128 = arith.mulf %125, %127 : vector<8x256xf32>
    %c1_i32_26 = arith.constant 1 : i32
    %129 = tpu.dynamic_rotate %116 by %c1_i32_26 dim 1 : vector<8x256xf32>, i32 -> vector<8x256xf32>
    %130 = vector.extract_strided_slice %2 {offsets = [3, 0], sizes = [1, 256], strides = [1, 1]} : vector<8x256xf32> to vector<1x256xf32>
    %131 = vector.broadcast %130 : vector<1x256xf32> to vector<8x256xf32>
    %132 = arith.mulf %129, %131 : vector<8x256xf32>
    %c255_i32_27 = arith.constant 255 : i32
    %133 = tpu.dynamic_rotate %116 by %c255_i32_27 dim 1 : vector<8x256xf32>, i32 -> vector<8x256xf32>
    %134 = vector.extract_strided_slice %2 {offsets = [4, 0], sizes = [1, 256], strides = [1, 1]} : vector<8x256xf32> to vector<1x256xf32>
    %135 = vector.broadcast %134 : vector<1x256xf32> to vector<8x256xf32>
    %136 = arith.mulf %133, %135 : vector<8x256xf32>
    %c241_i32_28 = arith.constant 241 : i32
    %137 = tpu.dynamic_rotate %116 by %c241_i32_28 dim 1 : vector<8x256xf32>, i32 -> vector<8x256xf32>
    %138 = vector.extract_strided_slice %2 {offsets = [5, 0], sizes = [1, 256], strides = [1, 1]} : vector<8x256xf32> to vector<1x256xf32>
    %139 = vector.broadcast %138 : vector<1x256xf32> to vector<8x256xf32>
    %140 = arith.mulf %137, %139 : vector<8x256xf32>
    %c240_i32_29 = arith.constant 240 : i32
    %141 = tpu.dynamic_rotate %116 by %c240_i32_29 dim 1 : vector<8x256xf32>, i32 -> vector<8x256xf32>
    %142 = vector.extract_strided_slice %2 {offsets = [6, 0], sizes = [1, 256], strides = [1, 1]} : vector<8x256xf32> to vector<1x256xf32>
    %143 = vector.broadcast %142 : vector<1x256xf32> to vector<8x256xf32>
    %144 = arith.mulf %141, %143 : vector<8x256xf32>
    %c239_i32_30 = arith.constant 239 : i32
    %145 = tpu.dynamic_rotate %116 by %c239_i32_30 dim 1 : vector<8x256xf32>, i32 -> vector<8x256xf32>
    %146 = vector.extract_strided_slice %2 {offsets = [7, 0], sizes = [1, 256], strides = [1, 1]} : vector<8x256xf32> to vector<1x256xf32>
    %147 = vector.broadcast %146 : vector<1x256xf32> to vector<8x256xf32>
    %148 = arith.mulf %145, %147 : vector<8x256xf32>
    %149 = tpu.concatenate %120, %124, %128, %132, %116, %136, %140, %144, %148 in 0 : vector<8x256xf32>, vector<8x256xf32>, vector<8x256xf32>, vector<8x256xf32>, vector<8x256xf32>, vector<8x256xf32>, vector<8x256xf32>, vector<8x256xf32>, vector<8x256xf32> -> vector<72x256xf32>
    %150 = vector.extract_strided_slice %3 {offsets = [0, 208], sizes = [8, 72], strides = [1, 1]} : vector<8x310xf32> to vector<8x72xf32>
    %cst_31 = arith.constant dense<0.000000e+00> : vector<8x256xf32>
    %151 = tpu.matmul %150, %149, %cst_31 {dimension_numbers = #tpu.dot_dimension_numbers<[1], [0], [0], [1], [0, 0, 1, 1], [], []>} : vector<8x72xf32>, vector<72x256xf32>, vector<8x256xf32> -> vector<8x256xf32>
    %152 = vector.extract_strided_slice %3 {offsets = [0, 307], sizes = [8, 1], strides = [1, 1]} : vector<8x310xf32> to vector<8x1xf32>
    %153 = vector.broadcast %152 : vector<8x1xf32> to vector<8x256xf32>
    %154 = arith.addf %151, %153 : vector<8x256xf32>
    %155 = arith.addf %154, %76 : vector<8x256xf32>
    %cst_32 = arith.constant 0.000000e+00 : f32
    %156 = vector.broadcast %cst_32 : f32 to vector<8x256xf32>
    %157 = arith.maximumf %155, %156 : vector<8x256xf32>
    %158 = tpu.concatenate %157, %76, %10 in 0 : vector<8x256xf32>, vector<8x256xf32>, vector<4x256xf32> -> vector<20x256xf32>
    %159 = vector.extract_strided_slice %3 {offsets = [0, 284], sizes = [8, 20], strides = [1, 1]} : vector<8x310xf32> to vector<8x20xf32>
    %cst_33 = arith.constant dense<0.000000e+00> : vector<8x256xf32>
    %160 = tpu.matmul %159, %158, %cst_33 {dimension_numbers = #tpu.dot_dimension_numbers<[1], [0], [0], [1], [0, 0, 1, 1], [], []>} : vector<8x20xf32>, vector<20x256xf32>, vector<8x256xf32> -> vector<8x256xf32>
    %161 = vector.extract_strided_slice %3 {offsets = [0, 309], sizes = [8, 1], strides = [1, 1]} : vector<8x310xf32> to vector<8x1xf32>
    %162 = vector.broadcast %161 : vector<8x1xf32> to vector<8x256xf32>
    %163 = arith.addf %160, %162 : vector<8x256xf32>
    %cst_34 = arith.constant 0.000000e+00 : f32
    %164 = vector.broadcast %cst_34 : f32 to vector<8x256xf32>
    %165 = arith.maximumf %163, %164 : vector<8x256xf32>
    %c0_35 = arith.constant 0 : index
    %c0_36 = arith.constant 0 : index
    %c0_37 = arith.constant 0 : index
    %166 = vector.load %arg4[%c0_35, %c0_36, %c0_37] : memref<1x8x256xf32, #tpu.memory_space<vmem>>, vector<1x8x256xf32>
    %167 = vector.shape_cast %166 : vector<1x8x256xf32> to vector<8x256xf32>
    %168 = vector.shape_cast %165 : vector<8x256xf32> to vector<1x8x256xf32>
    tpu.vector_store %arg4[%c0_35, %c0_36, %c0_37], %168 {strides = array<i32>} : memref<1x8x256xf32, #tpu.memory_space<vmem>>, vector<1x8x256xf32>,
    return
  }
  func.func @transform_0(%arg0: i32) -> (i32, i32, i32) {
    %c0_i32 = arith.constant 0 : i32
    %c0_i32_0 = arith.constant 0 : i32
    %c0_i32_1 = arith.constant 0 : i32
    return %arg0, %c0_i32, %c0_i32_0 : i32, i32, i32
  }
  func.func @transform_1(%arg0: i32) -> (i32, i32) {
    %c0_i32 = arith.constant 0 : i32
    %c0_i32_0 = arith.constant 0 : i32
    %c0_i32_1 = arith.constant 0 : i32
    return %c0_i32, %c0_i32_0 : i32, i32
  }
  func.func @transform_2(%arg0: i32) -> (i32, i32) {
    %c0_i32 = arith.constant 0 : i32
    %c0_i32_0 = arith.constant 0 : i32
    %c0_i32_1 = arith.constant 0 : i32
    return %c0_i32, %c0_i32_0 : i32, i32
  }
  func.func @transform_3(%arg0: i32) -> (i32, i32, i32) {
    %c0_i32 = arith.constant 0 : i32
    %c0_i32_0 = arith.constant 0 : i32
    %c0_i32_1 = arith.constant 0 : i32
    return %arg0, %c0_i32, %c0_i32_0 : i32, i32, i32
  }
}

</mosaic_0001>

<llo_original>
// kernel: tree_forward_pallas.1
$region0: #{tree_forward_pallas.1}
  #allocation0 [shape = 'u32[]', space=smem, size = 0x4, offset = 0x4, fixed_abs, tag = 'smem constant byte address 0x4 - core index']
  #allocation1 [shape = 'u32[144,128]{1,0:T(1,128)}', space=vmem, size = 0x12000, scoped, tag = 'internal scratch']
  %s0 = inlined_call_operand.vmem [shape: f32[2,16,256], index: 0, kind: input, shape index: {}]
  %s1 = inlined_call_operand.vmem [shape: f32[8,256], index: 1, kind: input, shape index: {}]
  %s2 = inlined_call_operand.vmem [shape: f32[8,310], index: 2, kind: input, shape index: {}]
  %s3 = inlined_call_operand.vmem [shape: f32[2,8,256], index: 3, kind: output, shape index: {}]
  %s4 = sld [smem:[#allocation0]]
  $region45: #{tree_forward_pallas.1} parent=0
    _
  %s6 = ssub.s32 1, %s4
  %s7 = scalar_select 0, %s6, %s4
  loop: start=0, step=1, limit=4
  $region2: #{tree_forward_pallas.1} parent=0 // loop_pre_header
    _
  $region3: #{tree_forward_pallas.1} parent=0 // loop_header
    %s9 = sphi 0, %s13
    %p10 = scmp.ge.s32.totalorder %s9, 4
    %s19 = sphi 0, %s21
    %s22 = sphi 0, %s19
    %s23 = sphi 0, %s22
    %s39 = sphi 0, %s23
    %s43 = sphi 0, %s43
    %s45 = sphi 0, %s43
    %s46 = sphi 0, %s45
    %s60 = sphi 0, %s46
    %s64 = sphi 0, %s64
    %s66 = sphi 0, %s64
    %s67 = sphi 0, %s66
    %s81 = sphi 0, %s67
    %s87 = sphi 0, %s89
    %s90 = sphi 0, %s87
    %s91 = sphi 0, %s90
    %s107 = sphi 0, %s91
  $region4: #{tree_forward_pallas.1} parent=0 // loop_header_branch
    %12 = sbr.rel (%p10) target = $region8
  $region5: #{tree_forward_pallas.1} parent=0 // loop_body
    %s14 = ssub.s32 %s9, 1
    %s15 = ssub.s32 %s9, 2
    %s16 = sadd.s32 %s9, 1
    %s17 = ssub.s32 %s9, %s16
    %p18 = scmp.eq.s32.totalorder %s17, 0
    %s20 = sadd.s32 %s19, 1
    %s21 = scalar_select %p18, %s19, %s20
    %p24 = pneg %p18
    %p25 = scmp.eq.s32.totalorder %s9, 1
    %p26 = por %p24, %p25
    %p27 = scmp.ne.s32.totalorder %s19, %s22
    %p28 = scmp.eq.s32.totalorder %s9, 0
    %p29 = por %p27, %p28
    %p30 = scmp.ne.s32.totalorder %s19, %s22
    %p31 = scmp.eq.s32.totalorder %s14, 1
    %p32 = por %p30, %p31
    %p33 = scmp.ne.s32.totalorder %s22, %s23
    %p34 = scmp.eq.s32.totalorder %s14, 0
    %p35 = por %p33, %p34
    %p36 = scmp.ne.s32.totalorder %s22, %s23
    %p37 = scmp.eq.s32.totalorder %s15, 1
    %p38 = por %p36, %p37
    %p40 = scmp.ne.s32.totalorder %s23, %s39
    %p41 = scmp.eq.s32.totalorder %s15, 0
    %p42 = por %p40, %p41
    %s44 = sadd.s32 %s43, 1
    %p47 = scmp.eq.s32.totalorder %s9, 1
    %p48 = scmp.ne.s32.totalorder %s43, %s45
    %p49 = scmp.eq.s32.totalorder %s9, 0
    %p50 = por %p48, %p49
    %p51 = scmp.ne.s32.totalorder %s43, %s45
    %p52 = scmp.eq.s32.totalorder %s14, 1
    %p53 = por %p51, %p52
    %p54 = scmp.ne.s32.totalorder %s45, %s46
    %p55 = scmp.eq.s32.totalorder %s14, 0
    %p56 = por %p54, %p55
    %p57 = scmp.ne.s32.totalorder %s45, %s46
    %p58 = scmp.eq.s32.totalorder %s15, 1
    %p59 = por %p57, %p58
    %p61 = scmp.ne.s32.totalorder %s46, %s60
    %p62 = scmp.eq.s32.totalorder %s15, 0
    %p63 = por %p61, %p62
    %s65 = sadd.s32 %s64, 1
    %p68 = scmp.eq.s32.totalorder %s9, 1
    %p69 = scmp.ne.s32.totalorder %s64, %s66
    %p70 = scmp.eq.s32.totalorder %s9, 0
    %p71 = por %p69, %p70
    %p72 = scmp.ne.s32.totalorder %s64, %s66
    %p73 = scmp.eq.s32.totalorder %s14, 1
    %p74 = por %p72, %p73
    %p75 = scmp.ne.s32.totalorder %s66, %s67
    %p76 = scmp.eq.s32.totalorder %s14, 0
    %p77 = por %p75, %p76
    %p78 = scmp.ne.s32.totalorder %s66, %s67
    %p79 = scmp.eq.s32.totalorder %s15, 1
    %p80 = por %p78, %p79
    %p82 = scmp.ne.s32.totalorder %s67, %s81
    %p83 = scmp.eq.s32.totalorder %s15, 0
    %p84 = por %p82, %p83
    %s85 = ssub.s32 %s9, %s16
    %p86 = scmp.eq.s32.totalorder %s85, 0
    %s88 = sadd.s32 %s87, 1
    %s89 = scalar_select %p86, %s87, %s88
    %p92 = pneg %p86
    %p93 = scmp.eq.s32.totalorder %s9, 1
    %p94 = por %p92, %p93
    %p95 = scmp.ne.s32.totalorder %s87, %s90
    %p96 = scmp.eq.s32.totalorder %s9, 0
    %p97 = por %p95, %p96
    %p98 = scmp.ne.s32.totalorder %s87, %s90
    %p99 = scmp.eq.s32.totalorder %s14, 1
    %p100 = por %p98, %p99
    %p101 = scmp.ne.s32.totalorder %s90, %s91
    %p102 = scmp.eq.s32.totalorder %s14, 0
    %p103 = por %p101, %p102
    %p104 = scmp.ne.s32.totalorder %s90, %s91
    %p105 = scmp.eq.s32.totalorder %s15, 1
    %p106 = por %p104, %p105
    %p108 = scmp.ne.s32.totalorder %s91, %s107
    %p109 = scmp.eq.s32.totalorder %s15, 0
    %p110 = por %p108, %p109
    %p111 = scmp.le.s32.totalorder 1, %s9
    %p112 = scmp.lt.s32.totalorder %s9, 3
    %p113 = pnand %p111, %p112
    %p114 = pneg %p113
    // Predicated region
    $region9: #{tree_forward_pallas.1} parent=5 // pred_check
      _
    $region10: #{tree_forward_pallas.1} parent=5 // pred_check_branch
      %116 = sbr.rel (%p113) target = $region12
    $region11: #{tree_forward_pallas.1} parent=5 // pred_region
      %s117 = ssub.s32 %s9, 1
      // Predicated region
      $region13: #{tree_forward_pallas.1} parent=11 // pred_check
        %p118 = pneg %p56
      $region14: #{tree_forward_pallas.1} parent=11 // pred_check_branch
        %120 = sbr.rel (%p118) target = $region16
      $region15: #{tree_forward_pallas.1} parent=11 // pred_region
        _
      $region16: #{tree_forward_pallas.1} parent=11 // pred_fallthru
        _
      // Predicated region
      $region17: #{tree_forward_pallas.1} parent=11 // pred_check
        %p121 = pneg %p77
      $region18: #{tree_forward_pallas.1} parent=11 // pred_check_branch
        %123 = sbr.rel (%p121) target = $region20
      $region19: #{tree_forward_pallas.1} parent=11 // pred_region
        _
      $region20: #{tree_forward_pallas.1} parent=11 // pred_fallthru
        _
    $region12: #{tree_forward_pallas.1} parent=5 // pred_fallthru
      _
    %p124 = scmp.lt.s32.totalorder %s9, 2
    // Predicated region
    $region21: #{tree_forward_pallas.1} parent=5 // pred_check
      %p125 = pneg %p124
    $region22: #{tree_forward_pallas.1} parent=5 // pred_check_branch
      %127 = sbr.rel (%p125) target = $region24
    $region23: #{tree_forward_pallas.1} parent=5 // pred_region
      // Predicated region
      $region25: #{tree_forward_pallas.1} parent=23 // pred_check
        %p128 = pneg %p29
      $region26: #{tree_forward_pallas.1} parent=23 // pred_check_branch
        %130 = sbr.rel (%p128) target = $region28
      $region27: #{tree_forward_pallas.1} parent=23 // pred_region
        %p131 = scmp.lt.s32.totalorder %s9, 1
        %s132 = scalar_select %p131, %s9, 1
        %s133 = smul.addr %s132, 4
        %s134 = smul.addr %s133, 8
        %s135 = scalar_lea.vmem %s0, %s134
      $region28: #{tree_forward_pallas.1} parent=23 // pred_fallthru
        _
    $region24: #{tree_forward_pallas.1} parent=5 // pred_fallthru
      _
    %p136 = scmp.le.s32.totalorder 1, %s9
    %p137 = scmp.lt.s32.totalorder %s9, 3
    %p138 = pnand %p136, %p137
    %p139 = pneg %p138
    // Predicated region
    $region29: #{tree_forward_pallas.1} parent=5 // pred_check
      _
    $region30: #{tree_forward_pallas.1} parent=5 // pred_check_branch
      %141 = sbr.rel (%p138) target = $region32
    $region31: #{tree_forward_pallas.1} parent=5 // pred_region
      %s142 = ssub.s32 %s9, 1
      %p143 = scmp.lt.s32.totalorder %s14, 1
      %s144 = scalar_select %p143, %s14, 1
      %s145 = smul.addr %s144, 4
      %s146 = smul.addr %s145, 8
      %s147 = scalar_lea.vmem %s0, %s146
      %p148 = pneg %p35
      %p149 = pneg %p32
      %p150 = pneg %p56
      %p151 = pneg %p53
      %p152 = pneg %p77
      %p153 = pneg %p74
      %p154 = pneg %p103
      %p155 = pneg %p100
      %p156 = scmp.lt.s32.totalorder %s14, 1
      %s157 = scalar_select %p156, %s14, 1
      %s158 = smul.addr %s157, 2
      %s159 = smul.addr %s158, 8
      %s160 = scalar_lea.vmem %s3, %s159
      %p161 = scmp.lt.s32.totalorder %s14, 1
      %s162 = scalar_select %p161, %s14, 1
      %s163 = smul.addr %s162, 4
      %s164 = smul.addr %s163, 8
      %s165 = scalar_lea.vmem %s0, %s164
      %p166 = scmp.lt.s32.totalorder %s14, 1
      %s167 = scalar_select %p166, %s14, 1
      %s168 = smul.addr %s167, 2
      %s169 = smul.addr %s168, 8
      %s170 = scalar_lea.vmem %s3, %s169
      %v171 = vld [vmem:[%s165] sm:$0xff]
      %v172 = vld [vmem:[%s165 + $0x8] sm:$0xff]
      %v173 = vld [vmem:[%s165 + $0x10] sm:$0xff]
      %v174 = vld [vmem:[%s165 + $0x18] sm:$0xff]
      %v175 = vld [vmem:[%s1] sm:$0xff]
      %v176 = vld [vmem:[%s1 + $0x8] sm:$0xff]
      %v177 = vld [vmem:[%s2] sm:$0xff]
      %v178 = vld [vmem:[%s2 + $0x8] sm:$0xff]
      %v179 = vld [vmem:[%s2 + $0x10] sm:$0xff]
      %v182 = vrot.slane %v171, 4
      %v183 = vrot.slane %v172, 4
      %v186 = vmax.f32 %v171, %v182
      %v187 = vmax.f32 %v172, %v183
      %v190 = vrot.slane %v173, 4
      %v191 = vrot.slane %v174, 4
      %v194 = vmax.f32 %v173, %v190
      %v195 = vmax.f32 %v174, %v191
      %v196 = vmax.f32 %v186, %v194
      %v197 = vmax.f32 %v187, %v195
      %199 = vset.pattern.permute.xlu0 52
      %200 = vperm.xlu0 %199, %v179
      %v201 = vpop.permute.xlu0 %200
      %203 = vrot.lane.b32.xlu0 %v179, 104
      %v204 = vpop.permute.xlu0 %203
      %vm205 = vcmask 31744
      %v206 = vsel %vm205, %v204, 0
      %vm208 = vcmask 1043456
      %v210 = vsel %vm208, %v196, 0
      %v213 = vsel %vm208, %v197, 0
      %215 = vmatprep.subr.mxu0 0.0
      %216 = vmatpush1.msra.mxu0 0.0
      %217 = vmatprep.subr.mxu0 0.0
      %218 = vmatpush1.msra.mxu0 0.0
      %219 = vmatprep.subr.mxu0 0.0
      %220 = vmatpush1.msra.mxu0 0.0
      %221 = vmatprep.subr.mxu0 0.0
      %222 = vmatpush1.msra.mxu0 0.0
      %223 = vmatprep.subr.mxu0 0.0
      %224 = vmatpush1.msra.mxu0 0.0
      %225 = vmatprep.subr.mxu0 0.0
      %226 = vmatpush1.msra.mxu0 0.0
      %227 = vmatprep.subr.mxu0 0.0
      %228 = vmatpush1.msra.mxu0 0.0
      %229 = vmatprep.subr.mxu0 0.0
      %230 = vmatpush1.msra.mxu0 0.0
      %231 = vmatprep.subr.mxu0 0.0
      %232 = vmatpush1.msra.mxu0 0.0
      %233 = vmatprep.subr.mxu0 0.0
      %234 = vmatpush1.msra.mxu0 0.0
      %235 = vmatprep.subr.mxu0 0.0
      %236 = vmatpush1.msra.mxu0 0.0
      %237 = vmatprep.subr.mxu0 0.0
      %238 = vmatpush1.msra.mxu0 0.0
      %239 = vmatprep.subr.mxu0 0.0
      %240 = vmatpush1.msra.mxu0 0.0
      %241 = vmatprep.subr.mxu0 0.0
      %242 = vmatpush1.msra.mxu0 0.0
      %243 = vmatprep.subr.mxu0 0.0
      %244 = vmatpush1.msra.mxu0 0.0
      %245 = vmatprep.subr.mxu0 %v213
      %246 = vmatpush1.msra.mxu0 %v210
      %247 = vmatprep.subr.mxu0 0.0
      %248 = vmatpush2.msra.mxu0 0.0
      %249 = vmatprep.subr.mxu0 0.0
      %250 = vmatpush2.msra.mxu0 0.0
      %251 = vmatprep.subr.mxu0 0.0
      %252 = vmatpush2.msra.mxu0 0.0
      %253 = vmatprep.subr.mxu0 0.0
      %254 = vmatpush2.msra.mxu0 0.0
      %255 = vmatprep.subr.mxu0 0.0
      %256 = vmatpush2.msra.mxu0 0.0
      %257 = vmatprep.subr.mxu0 0.0
      %258 = vmatpush2.msra.mxu0 0.0
      %259 = vmatprep.subr.mxu0 0.0
      %260 = vmatpush2.msra.mxu0 0.0
      %261 = vmatprep.subr.mxu0 0.0
      %262 = vmatpush2.msra.mxu0 0.0
      %263 = vmatprep.subr.mxu0 0.0
      %264 = vmatpush2.msra.mxu0 0.0
      %265 = vmatprep.subr.mxu0 0.0
      %266 = vmatpush2.msra.mxu0 0.0
      %267 = vmatprep.subr.mxu0 0.0
      %268 = vmatpush2.msra.mxu0 0.0
      %269 = vmatprep.subr.mxu0 0.0
      %270 = vmatpush2.msra.mxu0 0.0
      %271 = vmatprep.subr.mxu0 0.0
      %272 = vmatpush2.msra.mxu0 0.0
      %273 = vmatprep.subr.mxu0 0.0
      %274 = vmatpush2.msra.mxu0 0.0
      %275 = vmatprep.subr.mxu0 0.0
      %276 = vmatpush2.msra.mxu0 0.0
      %277 = vmatprep.subr.mxu0 0.0
      %278 = vmatpush2.msra.mxu0 0.0
      %279 = vmatprep.mubr.f32.mxu0 0.0
      %280 = vmatmul.mubr.f32.gmra.mxu0 %v206
      %v281 = vpop.f32.mrf.mxu0
      %v282 = vadd.f32 %v201, %v281
      %v283 = vpop.f32.mrf.mxu0
      %v284 = vadd.f32 %v201, %v283
      %285 = vdwg.mxu0
      %286 = vrot.lane.b32.xlu0 %v171, 1
      %v287 = vpop.permute.xlu0 %286
      %288 = vrot.lane.b32.xlu0 %v173, 1
      %v289 = vpop.permute.xlu0 %288
      %290 = vrot.lane.b32.xlu0 %v172, 1
      %v291 = vpop.permute.xlu0 %290
      %292 = vrot.lane.b32.xlu0 %v174, 1
      %v293 = vpop.permute.xlu0 %292
      %v294 = vlaneseq
      %v295 = vand.u32 %v294, 127
      %vm296 = vcmp.lt.s32.totalorder %v295, 1
      %v297 = vsel %vm296, %v287, %v291
      %v298 = vsel %vm296, %v289, %v293
      %v299 = vsel %vm296, %v291, %v287
      %v300 = vsel %vm296, %v293, %v289
      %v301 = vlaneseq
      %v302 = vshrl.u32 %v301, 7
      %v303 = vsub.s32 3, %v302
      %v304 = vrot.slane %v175, %v303
      %v305 = vlaneseq
      %v306 = vshrl.u32 %v305, 7
      %v307 = vsub.s32 3, %v306
      %v308 = vrot.slane %v176, %v307
      %v309 = vmul.f32 %v299, %v304
      %v310 = vmul.f32 %v297, %v308
      %v311 = vmul.f32 %v300, %v304
      %v312 = vmul.f32 %v298, %v308
      %313 = vrot.lane.b32.xlu0 %v171, 16
      %v314 = vpop.permute.xlu0 %313
      %315 = vrot.lane.b32.xlu0 %v173, 16
      %v316 = vpop.permute.xlu0 %315
      %317 = vrot.lane.b32.xlu0 %v172, 16
      %v318 = vpop.permute.xlu0 %317
      %319 = vrot.lane.b32.xlu0 %v174, 16
      %v320 = vpop.permute.xlu0 %319
      %vm321 = vcmp.lt.s32.totalorder %v295, 16
      %v322 = vsel %vm321, %v314, %v318
      %v323 = vsel %vm321, %v316, %v320
      %v324 = vsel %vm321, %v318, %v314
      %v325 = vsel %vm321, %v320, %v316
      %v326 = vlaneseq
      %v327 = vshrl.u32 %v326, 7
      %v328 = vsub.s32 1, %v327
      %v329 = vrot.slane %v175, %v328
      %v330 = vlaneseq
      %v331 = vshrl.u32 %v330, 7
      %v332 = vsub.s32 1, %v331
      %v333 = vrot.slane %v176, %v332
      %v334 = vmul.f32 %v324, %v329
      %v335 = vmul.f32 %v322, %v333
      %v336 = vmul.f32 %v325, %v329
      %v337 = vmul.f32 %v323, %v333
      %338 = vrot.lane.b32.xlu0 %v171, 17
      %v339 = vpop.permute.xlu0 %338
      %340 = vrot.lane.b32.xlu0 %v173, 17
      %v341 = vpop.permute.xlu0 %340
      %342 = vrot.lane.b32.xlu0 %v172, 17
      %v343 = vpop.permute.xlu0 %342
      %344 = vrot.lane.b32.xlu0 %v174, 17
      %v345 = vpop.permute.xlu0 %344
      %vm346 = vcmp.lt.s32.totalorder %v295, 17
      %v347 = vsel %vm346, %v339, %v343
      %v348 = vsel %vm346, %v341, %v345
      %v349 = vsel %vm346, %v343, %v339
      %v350 = vsel %vm346, %v345, %v341
      %v351 = vlaneseq
      %v352 = vshrl.u32 %v351, 7
      %v353 = vsub.s32 0, %v352
      %v354 = vrot.slane %v175, %v353
      %v355 = vlaneseq
      %v356 = vshrl.u32 %v355, 7
      %v357 = vsub.s32 0, %v356
      %v358 = vrot.slane %v176, %v357
      %v359 = vmul.f32 %v349, %v354
      %v360 = vmul.f32 %v347, %v358
      %v361 = vmul.f32 %v350, %v354
      %v362 = vmul.f32 %v348, %v358
      %363 = vset.pattern.permute.xlu0 48
      %364 = vperm.xlu0 %363, %v179
      %v365 = vpop.permute.xlu0 %364
      %vm367 = vcmask 523264
      %v369 = vsel %vm367, %v177, 0
      %371 = vmatprep.subr.mxu0 0.0
      %372 = vmatpush1.msra.mxu0 0.0
      %373 = vmatprep.subr.mxu0 0.0
      %374 = vmatpush1.msra.mxu0 0.0
      %375 = vmatprep.subr.mxu0 0.0
      %376 = vmatpush1.msra.mxu0 0.0
      %377 = vmatprep.subr.mxu0 0.0
      %378 = vmatpush1.msra.mxu0 0.0
      %379 = vmatprep.subr.mxu0 0.0
      %380 = vmatpush1.msra.mxu0 0.0
      %381 = vmatprep.subr.mxu0 0.0
      %382 = vmatpush1.msra.mxu0 0.0
      %383 = vmatprep.subr.mxu0 0.0
      %384 = vmatpush1.msra.mxu0 0.0
      %385 = vmatprep.subr.mxu0 0.0
      %386 = vmatpush1.msra.mxu0 0.0
      %387 = vmatprep.subr.mxu0 %v362
      %388 = vmatpush1.msra.mxu0 %v361
      %389 = vmatprep.subr.mxu0 %v360
      %390 = vmatpush1.msra.mxu0 %v359
      %391 = vmatprep.subr.mxu0 %v337
      %392 = vmatpush1.msra.mxu0 %v336
      %393 = vmatprep.subr.mxu0 %v335
      %394 = vmatpush1.msra.mxu0 %v334
      %395 = vmatprep.subr.mxu0 %v312
      %396 = vmatpush1.msra.mxu0 %v311
      %397 = vmatprep.subr.mxu0 %v310
      %398 = vmatpush1.msra.mxu0 %v309
      %399 = vmatprep.subr.mxu0 %v174
      %400 = vmatpush1.msra.mxu0 %v173
      %401 = vmatprep.subr.mxu0 %v172
      %402 = vmatpush1.msra.mxu0 %v171
      %403 = vmatprep.subr.mxu0 0.0
      %404 = vmatpush2.msra.mxu0 0.0
      %405 = vmatprep.subr.mxu0 0.0
      %406 = vmatpush2.msra.mxu0 0.0
      %407 = vmatprep.subr.mxu0 0.0
      %408 = vmatpush2.msra.mxu0 0.0
      %409 = vmatprep.subr.mxu0 0.0
      %410 = vmatpush2.msra.mxu0 0.0
      %411 = vmatprep.subr.mxu0 0.0
      %412 = vmatpush2.msra.mxu0 0.0
      %413 = vmatprep.subr.mxu0 0.0
      %414 = vmatpush2.msra.mxu0 0.0
      %415 = vmatprep.subr.mxu0 0.0
      %416 = vmatpush2.msra.mxu0 0.0
      %417 = vmatprep.subr.mxu0 0.0
      %418 = vmatpush2.msra.mxu0 0.0
      %419 = vmatprep.subr.mxu0 0.0
      %420 = vmatpush2.msra.mxu0 0.0
      %421 = vmatprep.subr.mxu0 0.0
      %422 = vmatpush2.msra.mxu0 0.0
      %423 = vmatprep.subr.mxu0 0.0
      %424 = vmatpush2.msra.mxu0 0.0
      %425 = vmatprep.subr.mxu0 0.0
      %426 = vmatpush2.msra.mxu0 0.0
      %427 = vmatprep.subr.mxu0 0.0
      %428 = vmatpush2.msra.mxu0 0.0
      %429 = vmatprep.subr.mxu0 0.0
      %430 = vmatpush2.msra.mxu0 0.0
      %431 = vmatprep.subr.mxu0 0.0
      %432 = vmatpush2.msra.mxu0 0.0
      %433 = vmatprep.subr.mxu0 0.0
      %434 = vmatpush2.msra.mxu0 0.0
      %435 = vmatprep.mubr.f32.mxu0 0.0
      %436 = vmatmul.mubr.f32.gmra.mxu0 %v369
      %v437 = vpop.f32.mrf.mxu0
      %v438 = vadd.f32 %v365, %v437
      %v439 = vpop.f32.mrf.mxu0
      %v440 = vadd.f32 %v365, %v439
      %441 = vdwg.mxu0
      %v442 = vmax.f32 %v438, 0.0
      %v443 = vmax.f32 %v440, 0.0
      %444 = vrot.lane.b32.xlu0 %v442, 17
      %v445 = vpop.permute.xlu0 %444
      %446 = vrot.lane.b32.xlu0 %v443, 17
      %v447 = vpop.permute.xlu0 %446
      %v448 = vsel %vm346, %v445, %v447
      %v449 = vsel %vm346, %v447, %v445
      %v450 = vmul.f32 %v449, %v354
      %v451 = vmul.f32 %v448, %v358
      %452 = vrot.lane.b32.xlu0 %v442, 16
      %v453 = vpop.permute.xlu0 %452
      %454 = vrot.lane.b32.xlu0 %v443, 16
      %v455 = vpop.permute.xlu0 %454
      %v456 = vsel %vm321, %v453, %v455
      %v457 = vsel %vm321, %v455, %v453
      %v458 = vmul.f32 %v457, %v329
      %v459 = vmul.f32 %v456, %v333
      %460 = vrot.lane.b32.xlu0 %v442, 15
      %v461 = vpop.permute.xlu0 %460
      %462 = vrot.lane.b32.xlu0 %v443, 15
      %v463 = vpop.permute.xlu0 %462
      %vm464 = vcmp.lt.s32.totalorder %v295, 15
      %v465 = vsel %vm464, %v461, %v463
      %v466 = vsel %vm464, %v463, %v461
      %v467 = vlaneseq
      %v468 = vshrl.u32 %v467, 7
      %v469 = vsub.s32 2, %v468
      %v470 = vrot.slane %v175, %v469
      %v471 = vlaneseq
      %v472 = vshrl.u32 %v471, 7
      %v473 = vsub.s32 2, %v472
      %v474 = vrot.slane %v176, %v473
      %v475 = vmul.f32 %v466, %v470
      %v476 = vmul.f32 %v465, %v474
      %477 = vrot.lane.b32.xlu0 %v442, 1
      %v478 = vpop.permute.xlu0 %477
      %479 = vrot.lane.b32.xlu0 %v443, 1
      %v480 = vpop.permute.xlu0 %479
      %v481 = vsel %vm296, %v478, %v480
      %v482 = vsel %vm296, %v480, %v478
      %v483 = vmul.f32 %v482, %v304
      %v484 = vmul.f32 %v481, %v308
      %485 = vrot.lane.b32.xlu0 %v442, 127
      %v486 = vpop.permute.xlu0 %485
      %487 = vrot.lane.b32.xlu0 %v443, 127
      %v488 = vpop.permute.xlu0 %487
      %vm489 = vcmp.lt.s32.totalorder %v295, 127
      %v490 = vsel %vm489, %v486, %v488
      %v491 = vsel %vm489, %v488, %v486
      %v492 = vlaneseq
      %v493 = vshrl.u32 %v492, 7
      %v494 = vsub.s32 4, %v493
      %v495 = vrot.slane %v175, %v494
      %v496 = vlaneseq
      %v497 = vshrl.u32 %v496, 7
      %v498 = vsub.s32 4, %v497
      %v499 = vrot.slane %v176, %v498
      %v500 = vmul.f32 %v490, %v495
      %v501 = vmul.f32 %v491, %v499
      %502 = vrot.lane.b32.xlu0 %v442, 113
      %v503 = vpop.permute.xlu0 %502
      %504 = vrot.lane.b32.xlu0 %v443, 113
      %v505 = vpop.permute.xlu0 %504
      %vm506 = vcmp.lt.s32.totalorder %v295, 113
      %v507 = vsel %vm506, %v503, %v505
      %v508 = vsel %vm506, %v505, %v503
      %v509 = vlaneseq
      %v510 = vshrl.u32 %v509, 7
      %v511 = vsub.s32 5, %v510
      %v512 = vrot.slane %v175, %v511
      %v513 = vlaneseq
      %v514 = vshrl.u32 %v513, 7
      %v515 = vsub.s32 5, %v514
      %v516 = vrot.slane %v176, %v515
      %v517 = vmul.f32 %v507, %v512
      %v518 = vmul.f32 %v508, %v516
      %519 = vrot.lane.b32.xlu0 %v442, 112
      %v520 = vpop.permute.xlu0 %519
      %521 = vrot.lane.b32.xlu0 %v443, 112
      %v522 = vpop.permute.xlu0 %521
      %vm523 = vcmp.lt.s32.totalorder %v295, 112
      %v524 = vsel %vm523, %v520, %v522
      %v525 = vsel %vm523, %v522, %v520
      %v526 = vlaneseq
      %v527 = vshrl.u32 %v526, 7
      %v528 = vsub.s32 6, %v527
      %v529 = vrot.slane %v175, %v528
      %v530 = vlaneseq
      %v531 = vshrl.u32 %v530, 7
      %v532 = vsub.s32 6, %v531
      %v533 = vrot.slane %v176, %v532
      %v534 = vmul.f32 %v524, %v529
      %v535 = vmul.f32 %v525, %v533
      %536 = vrot.lane.b32.xlu0 %v442, 111
      %v537 = vpop.permute.xlu0 %536
      %538 = vrot.lane.b32.xlu0 %v443, 111
      %v539 = vpop.permute.xlu0 %538
      %vm540 = vcmp.lt.s32.totalorder %v295, 111
      %v541 = vsel %vm540, %v537, %v539
      %v542 = vsel %vm540, %v539, %v537
      %v543 = vlaneseq
      %v544 = vshrl.u32 %v543, 7
      %v545 = vsub.s32 7, %v544
      %v546 = vrot.slane %v175, %v545
      %v547 = vlaneseq
      %v548 = vshrl.u32 %v547, 7
      %v549 = vsub.s32 7, %v548
      %v550 = vrot.slane %v176, %v549
      %v551 = vmul.f32 %v541, %v546
      %v552 = vmul.f32 %v542, %v550
      %553 = vset.pattern.permute.xlu0 49
      %554 = vperm.xlu0 %553, %v179
      %v555 = vpop.permute.xlu0 %554
      %558 = vrot.lane.b32.xlu0 %v177, 64
      %v559 = vpop.permute.xlu0 %558
      %560 = vrot.lane.b32.xlu0 %v178, 64
      %v561 = vpop.permute.xlu0 %560
      %v562 = vsel %vm367, %v559, %v561
      %vm563 = vcmask 588800
      %v564 = vsel %vm563, %v562, 0
      %566 = vmatprep.subr.mxu0 0.0
      %567 = vmatpush1.msra.mxu0 0.0
      %568 = vmatprep.subr.mxu0 0.0
      %569 = vmatpush1.msra.mxu0 0.0
      %570 = vmatprep.subr.mxu0 0.0
      %571 = vmatpush1.msra.mxu0 0.0
      %572 = vmatprep.subr.mxu0 0.0
      %573 = vmatpush1.msra.mxu0 0.0
      %574 = vmatprep.subr.mxu0 0.0
      %575 = vmatpush1.msra.mxu0 0.0
      %576 = vmatprep.subr.mxu0 0.0
      %577 = vmatpush1.msra.mxu0 0.0
      %578 = vmatprep.subr.mxu0 0.0
      %579 = vmatpush1.msra.mxu0 0.0
      %580 = vmatprep.subr.mxu0 %v552
      %581 = vmatpush1.msra.mxu0 %v551
      %582 = vmatprep.subr.mxu0 %v535
      %583 = vmatpush1.msra.mxu0 %v534
      %584 = vmatprep.subr.mxu0 %v518
      %585 = vmatpush1.msra.mxu0 %v517
      %586 = vmatprep.subr.mxu0 %v501
      %587 = vmatpush1.msra.mxu0 %v500
      %588 = vmatprep.subr.mxu0 %v443
      %589 = vmatpush1.msra.mxu0 %v442
      %590 = vmatprep.subr.mxu0 %v484
      %591 = vmatpush1.msra.mxu0 %v483
      %592 = vmatprep.subr.mxu0 %v476
      %593 = vmatpush1.msra.mxu0 %v475
      %594 = vmatprep.subr.mxu0 %v459
      %595 = vmatpush1.msra.mxu0 %v458
      %596 = vmatprep.subr.mxu0 %v451
      %597 = vmatpush1.msra.mxu0 %v450
      %598 = vmatprep.subr.mxu0 0.0
      %599 = vmatpush2.msra.mxu0 0.0
      %600 = vmatprep.subr.mxu0 0.0
      %601 = vmatpush2.msra.mxu0 0.0
      %602 = vmatprep.subr.mxu0 0.0
      %603 = vmatpush2.msra.mxu0 0.0
      %604 = vmatprep.subr.mxu0 0.0
      %605 = vmatpush2.msra.mxu0 0.0
      %606 = vmatprep.subr.mxu0 0.0
      %607 = vmatpush2.msra.mxu0 0.0
      %608 = vmatprep.subr.mxu0 0.0
      %609 = vmatpush2.msra.mxu0 0.0
      %610 = vmatprep.subr.mxu0 0.0
      %611 = vmatpush2.msra.mxu0 0.0
      %612 = vmatprep.subr.mxu0 0.0
      %613 = vmatpush2.msra.mxu0 0.0
      %614 = vmatprep.subr.mxu0 0.0
      %615 = vmatpush2.msra.mxu0 0.0
      %616 = vmatprep.subr.mxu0 0.0
      %617 = vmatpush2.msra.mxu0 0.0
      %618 = vmatprep.subr.mxu0 0.0
      %619 = vmatpush2.msra.mxu0 0.0
      %620 = vmatprep.subr.mxu0 0.0
      %621 = vmatpush2.msra.mxu0 0.0
      %622 = vmatprep.subr.mxu0 0.0
      %623 = vmatpush2.msra.mxu0 0.0
      %624 = vmatprep.subr.mxu0 0.0
      %625 = vmatpush2.msra.mxu0 0.0
      %626 = vmatprep.subr.mxu0 0.0
      %627 = vmatpush2.msra.mxu0 0.0
      %628 = vmatprep.subr.mxu0 0.0
      %629 = vmatpush2.msra.mxu0 0.0
      %630 = vmatprep.mubr.f32.mxu0 0.0
      %631 = vmatmul.mubr.f32.gmra.mxu0 %v564
      %v632 = vpop.f32.mrf.mxu0
      %v633 = vadd.f32 %v555, %v632
      %v634 = vpop.f32.mrf.mxu0
      %v635 = vadd.f32 %v555, %v634
      %636 = vdwg.mxu0
      %v637 = vadd.f32 %v633, %v282
      %v638 = vadd.f32 %v635, %v284
      %v639 = vmax.f32 %v637, 0.0
      %v640 = vmax.f32 %v638, 0.0
      %641 = vrot.lane.b32.xlu0 %v639, 17
      %v642 = vpop.permute.xlu0 %641
      %643 = vrot.lane.b32.xlu0 %v640, 17
      %v644 = vpop.permute.xlu0 %643
      %v645 = vsel %vm346, %v642, %v644
      %v646 = vsel %vm346, %v644, %v642
      %v647 = vmul.f32 %v646, %v354
      %v648 = vmul.f32 %v645, %v358
      %649 = vrot.lane.b32.xlu0 %v639, 16
      %v650 = vpop.permute.xlu0 %649
      %651 = vrot.lane.b32.xlu0 %v640, 16
      %v652 = vpop.permute.xlu0 %651
      %v653 = vsel %vm321, %v650, %v652
      %v654 = vsel %vm321, %v652, %v650
      %v655 = vmul.f32 %v654, %v329
      %v656 = vmul.f32 %v653, %v333
      %657 = vrot.lane.b32.xlu0 %v639, 15
      %v658 = vpop.permute.xlu0 %657
      %659 = vrot.lane.b32.xlu0 %v640, 15
      %v660 = vpop.permute.xlu0 %659
      %v661 = vsel %vm464, %v658, %v660
      %v662 = vsel %vm464, %v660, %v658
      %v663 = vmul.f32 %v662, %v470
      %v664 = vmul.f32 %v661, %v474
      %665 = vrot.lane.b32.xlu0 %v639, 1
      %v666 = vpop.permute.xlu0 %665
      %667 = vrot.lane.b32.xlu0 %v640, 1
      %v668 = vpop.permute.xlu0 %667
      %v669 = vsel %vm296, %v666, %v668
      %v670 = vsel %vm296, %v668, %v666
      %v671 = vmul.f32 %v670, %v304
      %v672 = vmul.f32 %v669, %v308
      %673 = vrot.lane.b32.xlu0 %v639, 127
      %v674 = vpop.permute.xlu0 %673
      %675 = vrot.lane.b32.xlu0 %v640, 127
      %v676 = vpop.permute.xlu0 %675
      %v677 = vsel %vm489, %v674, %v676
      %v678 = vsel %vm489, %v676, %v674
      %v679 = vmul.f32 %v677, %v495
      %v680 = vmul.f32 %v678, %v499
      %681 = vrot.lane.b32.xlu0 %v639, 113
      %v682 = vpop.permute.xlu0 %681
      %683 = vrot.lane.b32.xlu0 %v640, 113
      %v684 = vpop.permute.xlu0 %683
      %v685 = vsel %vm506, %v682, %v684
      %v686 = vsel %vm506, %v684, %v682
      %v687 = vmul.f32 %v685, %v512
      %v688 = vmul.f32 %v686, %v516
      %689 = vrot.lane.b32.xlu0 %v639, 112
      %v690 = vpop.permute.xlu0 %689
      %691 = vrot.lane.b32.xlu0 %v640, 112
      %v692 = vpop.permute.xlu0 %691
      %v693 = vsel %vm523, %v690, %v692
      %v694 = vsel %vm523, %v692, %v690
      %v695 = vmul.f32 %v693, %v529
      %v696 = vmul.f32 %v694, %v533
      %697 = vrot.lane.b32.xlu0 %v639, 111
      %v698 = vpop.permute.xlu0 %697
      %699 = vrot.lane.b32.xlu0 %v640, 111
      %v700 = vpop.permute.xlu0 %699
      %v701 = vsel %vm540, %v698, %v700
      %v702 = vsel %vm540, %v700, %v698
      %v703 = vmul.f32 %v701, %v546
      %v704 = vmul.f32 %v702, %v550
      %705 = vset.pattern.permute.xlu0 50
      %706 = vperm.xlu0 %705, %v179
      %v707 = vpop.permute.xlu0 %706
      %709 = vrot.lane.b32.xlu0 %v178, 120
      %v710 = vpop.permute.xlu0 %709
      %v711 = vsel %vm563, %v710, 0
      %713 = vmatprep.subr.mxu0 0.0
      %714 = vmatpush1.msra.mxu0 0.0
      %715 = vmatprep.subr.mxu0 0.0
      %716 = vmatpush1.msra.mxu0 0.0
      %717 = vmatprep.subr.mxu0 0.0
      %718 = vmatpush1.msra.mxu0 0.0
      %719 = vmatprep.subr.mxu0 0.0
      %720 = vmatpush1.msra.mxu0 0.0
      %721 = vmatprep.subr.mxu0 0.0
      %722 = vmatpush1.msra.mxu0 0.0
      %723 = vmatprep.subr.mxu0 0.0
      %724 = vmatpush1.msra.mxu0 0.0
      %725 = vmatprep.subr.mxu0 0.0
      %726 = vmatpush1.msra.mxu0 0.0
      %727 = vmatprep.subr.mxu0 %v704
      %728 = vmatpush1.msra.mxu0 %v703
      %729 = vmatprep.subr.mxu0 %v696
      %730 = vmatpush1.msra.mxu0 %v695
      %731 = vmatprep.subr.mxu0 %v688
      %732 = vmatpush1.msra.mxu0 %v687
      %733 = vmatprep.subr.mxu0 %v680
      %734 = vmatpush1.msra.mxu0 %v679
      %735 = vmatprep.subr.mxu0 %v640
      %736 = vmatpush1.msra.mxu0 %v639
      %737 = vmatprep.subr.mxu0 %v672
      %738 = vmatpush1.msra.mxu0 %v671
      %739 = vmatprep.subr.mxu0 %v664
      %740 = vmatpush1.msra.mxu0 %v663
      %741 = vmatprep.subr.mxu0 %v656
      %742 = vmatpush1.msra.mxu0 %v655
      %743 = vmatprep.subr.mxu0 %v648
      %744 = vmatpush1.msra.mxu0 %v647
      %745 = vmatprep.subr.mxu0 0.0
      %746 = vmatpush2.msra.mxu0 0.0
      %747 = vmatprep.subr.mxu0 0.0
      %748 = vmatpush2.msra.mxu0 0.0
      %749 = vmatprep.subr.mxu0 0.0
      %750 = vmatpush2.msra.mxu0 0.0
      %751 = vmatprep.subr.mxu0 0.0
      %752 = vmatpush2.msra.mxu0 0.0
      %753 = vmatprep.subr.mxu0 0.0
      %754 = vmatpush2.msra.mxu0 0.0
      %755 = vmatprep.subr.mxu0 0.0
      %756 = vmatpush2.msra.mxu0 0.0
      %757 = vmatprep.subr.mxu0 0.0
      %758 = vmatpush2.msra.mxu0 0.0
      %759 = vmatprep.subr.mxu0 0.0
      %760 = vmatpush2.msra.mxu0 0.0
      %761 = vmatprep.subr.mxu0 0.0
      %762 = vmatpush2.msra.mxu0 0.0
      %763 = vmatprep.subr.mxu0 0.0
      %764 = vmatpush2.msra.mxu0 0.0
      %765 = vmatprep.subr.mxu0 0.0
      %766 = vmatpush2.msra.mxu0 0.0
      %767 = vmatprep.subr.mxu0 0.0
      %768 = vmatpush2.msra.mxu0 0.0
      %769 = vmatprep.subr.mxu0 0.0
      %770 = vmatpush2.msra.mxu0 0.0
      %771 = vmatprep.subr.mxu0 0.0
      %772 = vmatpush2.msra.mxu0 0.0
      %773 = vmatprep.subr.mxu0 0.0
      %774 = vmatpush2.msra.mxu0 0.0
      %775 = vmatprep.subr.mxu0 0.0
      %776 = vmatpush2.msra.mxu0 0.0
      %777 = vmatprep.mubr.f32.mxu0 0.0
      %778 = vmatmul.mubr.f32.gmra.mxu0 %v711
      %v779 = vpop.f32.mrf.mxu0
      %v780 = vadd.f32 %v707, %v779
      %v781 = vpop.f32.mrf.mxu0
      %v782 = vadd.f32 %v707, %v781
      %783 = vdwg.mxu0
      %v784 = vmax.f32 %v780, 0.0
      %v785 = vmax.f32 %v782, 0.0
      %786 = vrot.lane.b32.xlu0 %v784, 17
      %v787 = vpop.permute.xlu0 %786
      %788 = vrot.lane.b32.xlu0 %v785, 17
      %v789 = vpop.permute.xlu0 %788
      %v790 = vsel %vm346, %v787, %v789
      %v791 = vsel %vm346, %v789, %v787
      %v792 = vmul.f32 %v791, %v354
      %v793 = vmul.f32 %v790, %v358
      %794 = vrot.lane.b32.xlu0 %v784, 16
      %v795 = vpop.permute.xlu0 %794
      %796 = vrot.lane.b32.xlu0 %v785, 16
      %v797 = vpop.permute.xlu0 %796
      %v798 = vsel %vm321, %v795, %v797
      %v799 = vsel %vm321, %v797, %v795
      %v800 = vmul.f32 %v799, %v329
      %v801 = vmul.f32 %v798, %v333
      %802 = vrot.lane.b32.xlu0 %v784, 15
      %v803 = vpop.permute.xlu0 %802
      %804 = vrot.lane.b32.xlu0 %v785, 15
      %v805 = vpop.permute.xlu0 %804
      %v806 = vsel %vm464, %v803, %v805
      %v807 = vsel %vm464, %v805, %v803
      %v808 = vmul.f32 %v807, %v470
      %v809 = vmul.f32 %v806, %v474
      %810 = vrot.lane.b32.xlu0 %v784, 1
      %v811 = vpop.permute.xlu0 %810
      %812 = vrot.lane.b32.xlu0 %v785, 1
      %v813 = vpop.permute.xlu0 %812
      %v814 = vsel %vm296, %v811, %v813
      %v815 = vsel %vm296, %v813, %v811
      %v816 = vmul.f32 %v815, %v304
      %v817 = vmul.f32 %v814, %v308
      %818 = vrot.lane.b32.xlu0 %v784, 127
      %v819 = vpop.permute.xlu0 %818
      %820 = vrot.lane.b32.xlu0 %v785, 127
      %v821 = vpop.permute.xlu0 %820
      %v822 = vsel %vm489, %v819, %v821
      %v823 = vsel %vm489, %v821, %v819
      %v824 = vmul.f32 %v822, %v495
      %v825 = vmul.f32 %v823, %v499
      %826 = vrot.lane.b32.xlu0 %v784, 113
      %v827 = vpop.permute.xlu0 %826
      %828 = vrot.lane.b32.xlu0 %v785, 113
      %v829 = vpop.permute.xlu0 %828
      %v830 = vsel %vm506, %v827, %v829
      %v831 = vsel %vm506, %v829, %v827
      %v832 = vmul.f32 %v830, %v512
      %v833 = vmul.f32 %v831, %v516
      %834 = vrot.lane.b32.xlu0 %v784, 112
      %v835 = vpop.permute.xlu0 %834
      %836 = vrot.lane.b32.xlu0 %v785, 112
      %v837 = vpop.permute.xlu0 %836
      %v838 = vsel %vm523, %v835, %v837
      %v839 = vsel %vm523, %v837, %v835
      %v840 = vmul.f32 %v838, %v529
      %v841 = vmul.f32 %v839, %v533
      %842 = vrot.lane.b32.xlu0 %v784, 111
      %v843 = vpop.permute.xlu0 %842
      %844 = vrot.lane.b32.xlu0 %v785, 111
      %v845 = vpop.permute.xlu0 %844
      %v846 = vsel %vm540, %v843, %v845
      %v847 = vsel %vm540, %v845, %v843
      %v848 = vmul.f32 %v846, %v546
      %v849 = vmul.f32 %v847, %v550
      %850 = vset.pattern.permute.xlu0 51
      %851 = vperm.xlu0 %850, %v179
      %v852 = vpop.permute.xlu0 %851
      %854 = vrot.lane.b32.xlu0 %v178, 48
      %v855 = vpop.permute.xlu0 %854
      %856 = vrot.lane.b32.xlu0 %v179, 48
      %v857 = vpop.permute.xlu0 %856
      %vm858 = vcmask 392192
      %v859 = vsel %vm858, %v855, %v857
      %v860 = vsel %vm563, %v859, 0
      %862 = vmatprep.subr.mxu0 0.0
      %863 = vmatpush1.msra.mxu0 0.0
      %864 = vmatprep.subr.mxu0 0.0
      %865 = vmatpush1.msra.mxu0 0.0
      %866 = vmatprep.subr.mxu0 0.0
      %867 = vmatpush1.msra.mxu0 0.0
      %868 = vmatprep.subr.mxu0 0.0
      %869 = vmatpush1.msra.mxu0 0.0
      %870 = vmatprep.subr.mxu0 0.0
      %871 = vmatpush1.msra.mxu0 0.0
      %872 = vmatprep.subr.mxu0 0.0
      %873 = vmatpush1.msra.mxu0 0.0
      %874 = vmatprep.subr.mxu0 0.0
      %875 = vmatpush1.msra.mxu0 0.0
      %876 = vmatprep.subr.mxu0 %v849
      %877 = vmatpush1.msra.mxu0 %v848
      %878 = vmatprep.subr.mxu0 %v841
      %879 = vmatpush1.msra.mxu0 %v840
      %880 = vmatprep.subr.mxu0 %v833
      %881 = vmatpush1.msra.mxu0 %v832
      %882 = vmatprep.subr.mxu0 %v825
      %883 = vmatpush1.msra.mxu0 %v824
      %884 = vmatprep.subr.mxu0 %v785
      %885 = vmatpush1.msra.mxu0 %v784
      %886 = vmatprep.subr.mxu0 %v817
      %887 = vmatpush1.msra.mxu0 %v816
      %888 = vmatprep.subr.mxu0 %v809
      %889 = vmatpush1.msra.mxu0 %v808
      %890 = vmatprep.subr.mxu0 %v801
      %891 = vmatpush1.msra.mxu0 %v800
      %892 = vmatprep.subr.mxu0 %v793
      %893 = vmatpush1.msra.mxu0 %v792
      %894 = vmatprep.subr.mxu0 0.0
      %895 = vmatpush2.msra.mxu0 0.0
      %896 = vmatprep.subr.mxu0 0.0
      %897 = vmatpush2.msra.mxu0 0.0
      %898 = vmatprep.subr.mxu0 0.0
      %899 = vmatpush2.msra.mxu0 0.0
      %900 = vmatprep.subr.mxu0 0.0
      %901 = vmatpush2.msra.mxu0 0.0
      %902 = vmatprep.subr.mxu0 0.0
      %903 = vmatpush2.msra.mxu0 0.0
      %904 = vmatprep.subr.mxu0 0.0
      %905 = vmatpush2.msra.mxu0 0.0
      %906 = vmatprep.subr.mxu0 0.0
      %907 = vmatpush2.msra.mxu0 0.0
      %908 = vmatprep.subr.mxu0 0.0
      %909 = vmatpush2.msra.mxu0 0.0
      %910 = vmatprep.subr.mxu0 0.0
      %911 = vmatpush2.msra.mxu0 0.0
      %912 = vmatprep.subr.mxu0 0.0
      %913 = vmatpush2.msra.mxu0 0.0
      %914 = vmatprep.subr.mxu0 0.0
      %915 = vmatpush2.msra.mxu0 0.0
      %916 = vmatprep.subr.mxu0 0.0
      %917 = vmatpush2.msra.mxu0 0.0
      %918 = vmatprep.subr.mxu0 0.0
      %919 = vmatpush2.msra.mxu0 0.0
      %920 = vmatprep.subr.mxu0 0.0
      %921 = vmatpush2.msra.mxu0 0.0
      %922 = vmatprep.subr.mxu0 0.0
      %923 = vmatpush2.msra.mxu0 0.0
      %924 = vmatprep.subr.mxu0 0.0
      %925 = vmatpush2.msra.mxu0 0.0
      %926 = vmatprep.mubr.f32.mxu0 0.0
      %927 = vmatmul.mubr.f32.gmra.mxu0 %v860
      %v928 = vpop.f32.mrf.mxu0
      %v929 = vadd.f32 %v852, %v928
      %v930 = vpop.f32.mrf.mxu0
      %v931 = vadd.f32 %v852, %v930
      %932 = vdwg.mxu0
      %v933 = vadd.f32 %v929, %v639
      %v934 = vadd.f32 %v931, %v640
      %v935 = vmax.f32 %v933, 0.0
      %v936 = vmax.f32 %v934, 0.0
      %937 = vset.pattern.permute.xlu0 53
      %938 = vperm.xlu0 %937, %v179
      %v939 = vpop.permute.xlu0 %938
      %941 = vrot.lane.b32.xlu0 %v179, 100
      %v942 = vpop.permute.xlu0 %941
      %vm943 = vcmask 162816
      %v944 = vsel %vm943, %v942, 0
      %946 = vmatprep.subr.mxu0 0.0
      %947 = vmatpush1.msra.mxu0 0.0
      %948 = vmatprep.subr.mxu0 0.0
      %949 = vmatpush1.msra.mxu0 0.0
      %950 = vmatprep.subr.mxu0 0.0
      %951 = vmatpush1.msra.mxu0 0.0
      %952 = vmatprep.subr.mxu0 0.0
      %953 = vmatpush1.msra.mxu0 0.0
      %954 = vmatprep.subr.mxu0 0.0
      %955 = vmatpush1.msra.mxu0 0.0
      %956 = vmatprep.subr.mxu0 0.0
      %957 = vmatpush1.msra.mxu0 0.0
      %958 = vmatprep.subr.mxu0 0.0
      %959 = vmatpush1.msra.mxu0 0.0
      %960 = vmatprep.subr.mxu0 0.0
      %961 = vmatpush1.msra.mxu0 0.0
      %962 = vmatprep.subr.mxu0 0.0
      %963 = vmatpush1.msra.mxu0 0.0
      %964 = vmatprep.subr.mxu0 0.0
      %965 = vmatpush1.msra.mxu0 0.0
      %966 = vmatprep.subr.mxu0 0.0
      %967 = vmatpush1.msra.mxu0 0.0
      %968 = vmatprep.subr.mxu0 0.0
      %969 = vmatpush1.msra.mxu0 0.0
      %970 = vmatprep.subr.mxu0 0.0
      %971 = vmatpush1.msra.mxu0 0.0
      %972 = vmatprep.subr.mxu0 %v213
      %973 = vmatpush1.msra.mxu0 %v210
      %974 = vmatprep.subr.mxu0 %v640
      %975 = vmatpush1.msra.mxu0 %v639
      %976 = vmatprep.subr.mxu0 %v936
      %977 = vmatpush1.msra.mxu0 %v935
      %978 = vmatprep.subr.mxu0 0.0
      %979 = vmatpush2.msra.mxu0 0.0
      %980 = vmatprep.subr.mxu0 0.0
      %981 = vmatpush2.msra.mxu0 0.0
      %982 = vmatprep.subr.mxu0 0.0
      %983 = vmatpush2.msra.mxu0 0.0
      %984 = vmatprep.subr.mxu0 0.0
      %985 = vmatpush2.msra.mxu0 0.0
      %986 = vmatprep.subr.mxu0 0.0
      %987 = vmatpush2.msra.mxu0 0.0
      %988 = vmatprep.subr.mxu0 0.0
      %989 = vmatpush2.msra.mxu0 0.0
      %990 = vmatprep.subr.mxu0 0.0
      %991 = vmatpush2.msra.mxu0 0.0
      %992 = vmatprep.subr.mxu0 0.0
      %993 = vmatpush2.msra.mxu0 0.0
      %994 = vmatprep.subr.mxu0 0.0
      %995 = vmatpush2.msra.mxu0 0.0
      %996 = vmatprep.subr.mxu0 0.0
      %997 = vmatpush2.msra.mxu0 0.0
      %998 = vmatprep.subr.mxu0 0.0
      %999 = vmatpush2.msra.mxu0 0.0
      %1000 = vmatprep.subr.mxu0 0.0
      %1001 = vmatpush2.msra.mxu0 0.0
      %1002 = vmatprep.subr.mxu0 0.0
      %1003 = vmatpush2.msra.mxu0 0.0
      %1004 = vmatprep.subr.mxu0 0.0
      %1005 = vmatpush2.msra.mxu0 0.0
      %1006 = vmatprep.subr.mxu0 0.0
      %1007 = vmatpush2.msra.mxu0 0.0
      %1008 = vmatprep.subr.mxu0 0.0
      %1009 = vmatpush2.msra.mxu0 0.0
      %1010 = vmatprep.mubr.f32.mxu0 0.0
      %1011 = vmatmul.mubr.f32.gmra.mxu0 %v944
      %v1012 = vpop.f32.mrf.mxu0
      %v1013 = vadd.f32 %v939, %v1012
      %v1014 = vpop.f32.mrf.mxu0
      %v1015 = vadd.f32 %v939, %v1014
      %1016 = vdwg.mxu0
      %v1017 = vmax.f32 %v1013, 0.0
      %v1018 = vmax.f32 %v1015, 0.0
      %1019 = vst [vmem:[%s170] sm:$0xff] %v1017
      %1020 = vst [vmem:[%s170 + $0x8] sm:$0xff] %v1018
      %p1021 = scmp.lt.s32.totalorder %s14, 1
      %s1022 = scalar_select %p1021, %s14, 1
      %s1023 = smul.addr %s1022, 2
      %s1024 = smul.addr %s1023, 8
      %s1025 = scalar_lea.vmem %s3, %s1024
      // Predicated region
      $region33: #{tree_forward_pallas.1} parent=31 // pred_check
        %p1026 = pneg %p100
      $region34: #{tree_forward_pallas.1} parent=31 // pred_check_branch
        %1028 = sbr.rel (%p1026) target = $region36
      $region35: #{tree_forward_pallas.1} parent=31 // pred_region
        _
      $region36: #{tree_forward_pallas.1} parent=31 // pred_fallthru
        _
    $region32: #{tree_forward_pallas.1} parent=5 // pred_fallthru
      _
    %p1029 = scmp.le.s32.totalorder 2, %s9
    // Predicated region
    $region37: #{tree_forward_pallas.1} parent=5 // pred_check
      %p1030 = pneg %p1029
    $region38: #{tree_forward_pallas.1} parent=5 // pred_check_branch
      %1032 = sbr.rel (%p1030) target = $region40
    $region39: #{tree_forward_pallas.1} parent=5 // pred_region
      %s1033 = ssub.s32 %s9, 2
      // Predicated region
      $region41: #{tree_forward_pallas.1} parent=39 // pred_check
        %p1034 = pneg %p106
      $region42: #{tree_forward_pallas.1} parent=39 // pred_check_branch
        %1036 = sbr.rel (%p1034) target = $region44
      $region43: #{tree_forward_pallas.1} parent=39 // pred_region
        %p1037 = scmp.lt.s32.totalorder %s15, 1
        %s1038 = scalar_select %p1037, %s15, 1
        %s1039 = smul.addr %s1038, 2
        %s1040 = smul.addr %s1039, 8
        %s1041 = scalar_lea.vmem %s3, %s1040
      $region44: #{tree_forward_pallas.1} parent=39 // pred_fallthru
        _
    $region40: #{tree_forward_pallas.1} parent=5 // pred_fallthru
      _
  $region6: #{tree_forward_pallas.1} parent=0 // loop_footer
    %s13 = sadd.s32 1, %s9
  $region7: #{tree_forward_pallas.1} parent=0 // loop_footer_branch
    %8 = sbr.rel target = $region3
  $region8: #{tree_forward_pallas.1} parent=0 // loop_exit
    _

</llo_original>
